<compile_context>
chip_gen: v7x
topology: tpu7x:2x2x1
jax: 0.10.0
libtpu: 0.0.40
codegen_flags: <defaults>
</compile_context>

<pallas_src>
import functools

import jax
import jax.numpy as jnp
from jax import lax
from jax.experimental import pallas as pl
from jax.experimental.pallas import tpu as pltpu

_LANE = 128


# ---------------------------------------------------------------------------
# Kernels
# ---------------------------------------------------------------------------

def _edge_dot_gather_kernel(src_ref, dst_ref, ew_ref, en_ref, out_ref):
    """Fused in-kernel gather + per-edge dot.

    src_ref/dst_ref: (1, TILE_E) int32 edge endpoint node ids (lane-dense).
    ew_ref:          (H, N) f32, (emb_n * d * scale)^T, resident across the grid.
    en_ref:          (H, N) f32, emb_n^T, resident across the grid.
    out_ref:         (1, TILE_E) f32 per-edge dot products (lane-dense).
    """
    n = ew_ref.shape[1]
    tile_e = out_ref.shape[1]
    row_ids = lax.broadcasted_iota(jnp.int32, (n, tile_e), 0)
    src_oh = (row_ids == src_ref[...]).astype(jnp.float32)        # (N, TILE_E)
    dst_oh = (row_ids == dst_ref[...]).astype(jnp.float32)        # (N, TILE_E)
    # One-hot gather on the (otherwise idle) MXU; HIGHEST keeps the f32 values exact.
    src_slab = jnp.dot(ew_ref[...], src_oh,
                       preferred_element_type=jnp.float32,
                       precision=lax.Precision.HIGHEST)            # (H, TILE_E)
    dst_slab = jnp.dot(en_ref[...], dst_oh,
                       preferred_element_type=jnp.float32,
                       precision=lax.Precision.HIGHEST)            # (H, TILE_E)
    out_ref[...] = jnp.sum(src_slab * dst_slab, axis=0, keepdims=True)


def _edge_dot_stream_kernel(src_ref, dst_ref, out_ref):
    """Streaming per-edge dot over pre-gathered (H, TILE_E) slabs (large-N fallback)."""
    p = src_ref[...].astype(jnp.float32) * dst_ref[...].astype(jnp.float32)
    out_ref[...] = jnp.sum(p, axis=0, keepdims=True)


# ---------------------------------------------------------------------------
# Static planning (pure Python; runs outside jit)
# ---------------------------------------------------------------------------

def _round_down(x, m):
    return (x // m) * m


def _round_up(x, m):
    return ((x + m - 1) // m) * m


def _vmem_capacity_bytes():
    try:
        return int(pltpu.get_tpu_info().vmem_capacity_bytes)
    except Exception:
        # Conservative fallback: v7x per-TensorCore VMEM (smallest of v5e/v6e/v7x).
        return 64 * 1024 * 1024


def _plan(E, H, N, force_streaming, tile_e_override):
    vmem_cap = _vmem_capacity_bytes()
    budget = vmem_cap // 3                       # per-call block budget (gen-aware)

    node_bytes = 2 * 2 * H * N * 4               # two resident (H,N) f32 mats, 2 buffers
    use_gather = (not force_streaming) and (N <= 4096) and (node_bytes <= budget // 2)

    e_pad128 = _round_up(max(E, 1), _LANE)

    if use_gather:
        # one-hots (2*N*4) + gathered slabs/product (~3*H*4) + idx/out buffers per edge
        per_edge = 8 * N + 12 * H + 24
        tile_e = (budget - node_bytes) // per_edge
    else:
        # 2 inputs x 2 buffers x H*4 + product + output per edge
        per_edge = 20 * H + 8
        tile_e = budget // per_edge
    tile_e = max(_LANE, _round_down(tile_e, _LANE))
    tile_e = min(tile_e, e_pad128)

    # Keep >= 2 grid steps when there is enough work so the ("parallel",) edge axis
    # can be split across v7x's two TensorCores (no effect on single-TC v5e/v6e).
    half = _round_down(e_pad128 // 2, _LANE)
    if half >= _LANE:
        tile_e = min(tile_e, half)

    if tile_e_override is not None:
        tile_e = max(_LANE, _round_down(int(tile_e_override), _LANE))
        tile_e = min(tile_e, e_pad128)

    num_tiles = max(1, (E + tile_e - 1) // tile_e)
    e_pad = num_tiles * tile_e

    vmem_need = tile_e * per_edge + (node_bytes if use_gather else 0)
    vmem_limit = int(min(vmem_cap * 3 // 4, max(16 * 1024 * 1024, 2 * vmem_need)))

    return use_gather, tile_e, num_tiles, e_pad, vmem_limit


# ---------------------------------------------------------------------------
# Forward
# ---------------------------------------------------------------------------

@functools.partial(
    jax.jit,
    static_argnames=("use_gather", "tile_e", "num_tiles", "e_pad", "vmem_limit"))
def _forward_impl(emb, src, dst, d, scale, *, use_gather, tile_e, num_tiles,
                  e_pad, vmem_limit):
    E = src.shape[0]
    N, H = emb.shape

    # Once-per-node work (O(N*H)), hoisted out of the per-edge path; scale folded into d.
    eps = jnp.float32(1e-12)
    emb_f32 = emb.astype(jnp.float32)
    norm = jnp.sqrt(jnp.sum(emb_f32 * emb_f32, axis=1, keepdims=True))
    emb_n = emb_f32 / jnp.maximum(norm, eps)                        # (N, H)
    scale_val = jnp.asarray(scale, jnp.float32).reshape(())
    ew = emb_n * (d.astype(jnp.float32) * scale_val)[None, :]       # (N, H)

    pad = e_pad - E
    src_i = src.astype(jnp.int32)
    dst_i = dst.astype(jnp.int32)

    if use_gather:
        ew_t = ew.T                                                  # (H, N)
        en_t = emb_n.T                                               # (H, N)
        src_row = jnp.pad(src_i, (0, pad)).reshape(1, e_pad)         # pad id 0 -> sliced off
        dst_row = jnp.pad(dst_i, (0, pad)).reshape(1, e_pad)
        out = pl.pallas_call(
            _edge_dot_gather_kernel,
            out_shape=jax.ShapeDtypeStruct((1, e_pad), jnp.float32),
            grid_spec=pltpu.PrefetchScalarGridSpec(
                num_scalar_prefetch=0,
                grid=(num_tiles,),
                in_specs=[
                    pl.BlockSpec((1, tile_e), lambda i: (0, i)),     # src ids
                    pl.BlockSpec((1, tile_e), lambda i: (0, i)),     # dst ids
                    pl.BlockSpec((H, N), lambda i: (0, 0)),          # ew_t, resident
                    pl.BlockSpec((H, N), lambda i: (0, 0)),          # en_t, resident
                ],
                out_specs=pl.BlockSpec((1, tile_e), lambda i: (0, i)),
            ),
            compiler_params=pltpu.CompilerParams(
                dimension_semantics=("parallel",),
                vmem_limit_bytes=vmem_limit),
        )(src_row, dst_row, ew_t, en_t)
    else:
        # Large-N fallback: gather rows along the MAJOR axis (DMA-friendly), then
        # transpose so edges land on the 128-wide lane axis.
        src_slab = jnp.take(ew, src_i, axis=0).T                     # (H, E)
        dst_slab = jnp.take(emb_n, dst_i, axis=0).T                  # (H, E)
        src_slab = jnp.pad(src_slab, ((0, 0), (0, pad)))
        dst_slab = jnp.pad(dst_slab, ((0, 0), (0, pad)))
        out = pl.pallas_call(
            _edge_dot_stream_kernel,
            out_shape=jax.ShapeDtypeStruct((1, e_pad), jnp.float32),
            grid_spec=pltpu.PrefetchScalarGridSpec(
                num_scalar_prefetch=0,
                grid=(num_tiles,),
                in_specs=[
                    pl.BlockSpec((H, tile_e), lambda i: (0, i)),
                    pl.BlockSpec((H, tile_e), lambda i: (0, i)),
                ],
                out_specs=pl.BlockSpec((1, tile_e), lambda i: (0, i)),
            ),
            compiler_params=pltpu.CompilerParams(
                dimension_semantics=("parallel",),
                vmem_limit_bytes=vmem_limit),
        )(src_slab, dst_slab)

    return out[0, :E].reshape(E, 1)


def local_emb_D_forward(emb, src, dst, d, scale, *, force_streaming=False, tile_e=None):
    """emb: (N, H); src/dst: (E,) int32 edge endpoints; d: (H,); scale: ()/(1,).
    Returns (E, 1) float32."""
    E = int(src.shape[0])
    N, H = int(emb.shape[0]), int(emb.shape[1])
    use_gather, tile, num_tiles, e_pad, vmem_limit = _plan(
        E, H, N, force_streaming, tile_e)
    return _forward_impl(emb, src, dst, d, scale,
                         use_gather=use_gather, tile_e=tile, num_tiles=num_tiles,
                         e_pad=e_pad, vmem_limit=vmem_limit)


def _reference(emb, src, dst, d, scale):
    eps = 1e-12
    n = jnp.sqrt(jnp.sum(emb * emb, axis=1, keepdims=True))
    emb_n = emb / jnp.maximum(n, eps)
    ew = emb_n * d[None, :]
    z = jnp.sum(ew[src] * emb_n[dst], axis=1, keepdims=True)
    return z * jnp.asarray(scale, jnp.float32).reshape(())


if __name__ == "__main__":
    key = jax.random.PRNGKey(0)

    def make_case(k, N, H, E):
        k1, k2, k3 = jax.random.split(k, 3)
        emb = jax.random.normal(k1, (N, H), dtype=jnp.float32)
        src = jax.random.randint(k2, (E,), 0, N, dtype=jnp.int32)
        dst = jax.random.randint(k3, (E,), 0, N, dtype=jnp.int32)
        d = jnp.ones((H,), dtype=jnp.float32)            # torch.ones(n_hidden)
        scale = jnp.full((1,), 0.5, dtype=jnp.float32)   # torch.full((1,), 0.5)
        return emb, src, dst, d, scale

    k_a, k_b = jax.random.split(key)

    # Case A: tiny graph (n_hidden=32) -> fused in-kernel one-hot gather path.
    emb, src, dst, d, scale = make_case(k_a, 16, 32, 24)
    ref = _reference(emb, src, dst, d, scale)
    out = jax.block_until_ready(local_emb_D_forward(emb, src, dst, d, scale))
    assert out.shape == (24, 1), out.shape
    assert jnp.allclose(out, ref, atol=1e-5, rtol=1e-5), (
        float(jnp.max(jnp.abs(out - ref))))

    # Case A': same inputs via the large-N streaming fallback path.
    out_s = jax.block_until_ready(
        local_emb_D_forward(emb, src, dst, d, scale, force_streaming=True))
    assert jnp.allclose(out_s, ref, atol=1e-5, rtol=1e-5), (
        float(jnp.max(jnp.abs(out_s - ref))))

    # Case B: multi-tile grid (tile_e forced to 128 -> 3 tiles + padding) on both paths.
    emb, src, dst, d, scale = make_case(k_b, 64, 32, 300)
    ref = _reference(emb, src, dst, d, scale)
    out_g = jax.block_until_ready(
        local_emb_D_forward(emb, src, dst, d, scale, tile_e=128))
    out_s = jax.block_until_ready(
        local_emb_D_forward(emb, src, dst, d, scale, force_streaming=True, tile_e=128))
    assert out_g.shape == (300, 1) and out_s.shape == (300, 1)
    assert jnp.allclose(out_g, ref, atol=1e-5, rtol=1e-5), (
        float(jnp.max(jnp.abs(out_g - ref))))
    assert jnp.allclose(out_s, ref, atol=1e-5, rtol=1e-5), (
        float(jnp.max(jnp.abs(out_s - ref))))

    print("KERNEL_OK")
</pallas_src>

<mosaic_0001>
module attributes {stable_mosaic.version = 11 : i64} {
  func.func @_edge_dot_gather_kernel(%arg0: i32, %arg1: memref<1x128xi32, #tpu.memory_space<vmem>>, %arg2: memref<1x128xi32, #tpu.memory_space<vmem>>, %arg3: memref<32x16xf32, #tpu.memory_space<vmem>>, %arg4: memref<32x16xf32, #tpu.memory_space<vmem>>, %arg5: memref<1x128xf32, #tpu.memory_space<vmem>>) attributes {dimension_semantics = [#tpu.dimension_semantics<parallel>], iteration_bounds = array<i64: 1>, scalar_prefetch = 0 : i64, scratch_operands = 0 : i64, tpu.core_type = #tpu.core_type<tc>, window_params = [{transform_indices = @transform_0, window_bounds = array<i64: 1, 128>}, {transform_indices = @transform_1, window_bounds = array<i64: 1, 128>}, {pipeline_mode = #tpu.pipeline_mode<synchronous>, transform_indices = @transform_2, window_bounds = array<i64: 32, 16>}, {pipeline_mode = #tpu.pipeline_mode<synchronous>, transform_indices = @transform_3, window_bounds = array<i64: 32, 16>}, {transform_indices = @transform_4, window_bounds = array<i64: 1, 128>}]} {
    %0 = tpu.iota {dimensions = array<i32: 0>} : vector<16x128xi32>
    %c0 = arith.constant 0 : index
    %c0_0 = arith.constant 0 : index
    %1 = vector.load %arg1[%c0, %c0_0] : memref<1x128xi32, #tpu.memory_space<vmem>>, vector<1x128xi32>
    %2 = vector.broadcast %1 : vector<1x128xi32> to vector<16x128xi32>
    %3 = arith.cmpi eq, %0, %2 : vector<16x128xi32>
    %4 = arith.extui %3 : vector<16x128xi1> to vector<16x128xi32>
    %5 = arith.sitofp %4 : vector<16x128xi32> to vector<16x128xf32>
    %c0_1 = arith.constant 0 : index
    %c0_2 = arith.constant 0 : index
    %6 = vector.load %arg2[%c0_1, %c0_2] : memref<1x128xi32, #tpu.memory_space<vmem>>, vector<1x128xi32>
    %7 = vector.broadcast %6 : vector<1x128xi32> to vector<16x128xi32>
    %8 = arith.cmpi eq, %0, %7 : vector<16x128xi32>
    %9 = arith.extui %8 : vector<16x128xi1> to vector<16x128xi32>
    %10 = arith.sitofp %9 : vector<16x128xi32> to vector<16x128xf32>
    %c0_3 = arith.constant 0 : index
    %c0_4 = arith.constant 0 : index
    %11 = vector.load %arg3[%c0_3, %c0_4] : memref<32x16xf32, #tpu.memory_space<vmem>>, vector<32x16xf32>
    %cst = arith.constant dense<0.000000e+00> : vector<32x128xf32>
    %12 = tpu.matmul %11, %5, %cst {dimension_numbers = #tpu.dot_dimension_numbers<[1], [0], [0], [1], [0, 0, 1, 1], [], []>, precision = #tpu.contract_precision<fp32>} : vector<32x16xf32>, vector<16x128xf32>, vector<32x128xf32> -> vector<32x128xf32>
    %c0_5 = arith.constant 0 : index
    %c0_6 = arith.constant 0 : index
    %13 = vector.load %arg4[%c0_5, %c0_6] : memref<32x16xf32, #tpu.memory_space<vmem>>, vector<32x16xf32>
    %cst_7 = arith.constant dense<0.000000e+00> : vector<32x128xf32>
    %14 = tpu.matmul %13, %10, %cst_7 {dimension_numbers = #tpu.dot_dimension_numbers<[1], [0], [0], [1], [0, 0, 1, 1], [], []>, precision = #tpu.contract_precision<fp32>} : vector<32x16xf32>, vector<16x128xf32>, vector<32x128xf32> -> vector<32x128xf32>
    %15 = arith.mulf %12, %14 : vector<32x128xf32>
    %cst_8 = arith.constant dense<0.000000e+00> : vector<128xf32>
    %16 = vector.multi_reduction <add>, %15, %cst_8 [0] : vector<32x128xf32> to vector<128xf32>
    %17 = vector.shape_cast %16 : vector<128xf32> to vector<1x128xf32>
    %c0_9 = arith.constant 0 : index
    %c0_10 = arith.constant 0 : index
    %18 = vector.load %arg5[%c0_9, %c0_10] : memref<1x128xf32, #tpu.memory_space<vmem>>, vector<1x128xf32>
    tpu.vector_store %arg5[%c0_9, %c0_10], %17 {strides = array<i32>} : memref<1x128xf32, #tpu.memory_space<vmem>>, vector<1x128xf32>,
    return
  }
  func.func @transform_0(%arg0: i32) -> (i32, i32) {
    %c0_i32 = arith.constant 0 : i32
    %c0_i32_0 = arith.constant 0 : i32
    return %c0_i32, %arg0 : i32, i32
  }
  func.func @transform_1(%arg0: i32) -> (i32, i32) {
    %c0_i32 = arith.constant 0 : i32
    %c0_i32_0 = arith.constant 0 : i32
    return %c0_i32, %arg0 : i32, i32
  }
  func.func @transform_2(%arg0: i32) -> (i32, i32) {
    %c0_i32 = arith.constant 0 : i32
    %c0_i32_0 = arith.constant 0 : i32
    %c0_i32_1 = arith.constant 0 : i32
    return %c0_i32, %c0_i32_0 : i32, i32
  }
  func.func @transform_3(%arg0: i32) -> (i32, i32) {
    %c0_i32 = arith.constant 0 : i32
    %c0_i32_0 = arith.constant 0 : i32
    %c0_i32_1 = arith.constant 0 : i32
    return %c0_i32, %c0_i32_0 : i32, i32
  }
  func.func @transform_4(%arg0: i32) -> (i32, i32) {
    %c0_i32 = arith.constant 0 : i32
    %c0_i32_0 = arith.constant 0 : i32
    return %c0_i32, %arg0 : i32, i32
  }
}

</mosaic_0001>

<llo_original>
// kernel: _forward_impl.1
$region0: #{_forward_impl.1}
  #allocation0 [shape = 'u32[]', space=smem, size = 0x4, offset = 0x4, fixed_abs, tag = 'smem constant byte address 0x4 - core index']
  #allocation1 [shape = 'u32[144,128]{1,0:T(1,128)}', space=vmem, size = 0x12000, scoped, tag = 'internal scratch']
  %s0 = inlined_call_operand.vmem [shape: s32[1,128], index: 0, kind: input, shape index: {}]
  %s1 = inlined_call_operand.vmem [shape: s32[1,128], index: 1, kind: input, shape index: {}]
  %s2 = inlined_call_operand.vmem [shape: f32[32,16], index: 2, kind: input, shape index: {}]
  %s3 = inlined_call_operand.vmem [shape: f32[32,16], index: 3, kind: input, shape index: {}]
  %s4 = inlined_call_operand.vmem [shape: f32[1,128], index: 4, kind: output, shape index: {}]
  %s5 = sld [smem:[#allocation0]]
  $region26: #{_forward_impl.1} parent=0
    _
  %s7 = ssub.s32 1, %s5
  %s8 = scalar_select 0, %s7, %s5
  // Predicated region
  $region2: #{_forward_impl.1} parent=0 // pred_check
    _
  $region3: #{_forward_impl.1} parent=0 // pred_check_branch
    %10 = sbr.rel (0) target = $region5
  $region4: #{_forward_impl.1} parent=0 // pred_region
    _
  $region5: #{_forward_impl.1} parent=0 // pred_fallthru
    _
  // Predicated region
  $region6: #{_forward_impl.1} parent=0 // pred_check
    _
  $region7: #{_forward_impl.1} parent=0 // pred_check_branch
    %12 = sbr.rel (0) target = $region9
  $region8: #{_forward_impl.1} parent=0 // pred_region
    _
  $region9: #{_forward_impl.1} parent=0 // pred_fallthru
    _
  // Predicated region
  $region10: #{_forward_impl.1} parent=0 // pred_check
    _
  $region11: #{_forward_impl.1} parent=0 // pred_check_branch
    %14 = sbr.rel (0) target = $region13
  $region12: #{_forward_impl.1} parent=0 // pred_region
    _
  $region13: #{_forward_impl.1} parent=0 // pred_fallthru
    _
  // Predicated region
  $region14: #{_forward_impl.1} parent=0 // pred_check
    _
  $region15: #{_forward_impl.1} parent=0 // pred_check_branch
    %16 = sbr.rel (0) target = $region17
  $region16: #{_forward_impl.1} parent=0 // pred_region
    _
  $region17: #{_forward_impl.1} parent=0 // pred_fallthru
    _
  %v17 = vlaneseq
  %v18 = vshrl.u32 %v17, 7
  %v19 = vadd.s32 %v18, 8
  %v20 = vld [vmem:[%s0] sm:$0x1]
  %v21 = vlaneseq
  %v22 = vshrl.u32 %v21, 7
  %v23 = vsub.s32 0, %v22
  %v24 = vrot.slane %v20, %v23
  %vm25 = vcmp.eq.s32.totalorder %v18, %v24
  %vm26 = vcmp.eq.s32.totalorder %v19, %v24
  %v27 = vsel %vm25, 1, 0
  %v28 = vsel %vm26, 1, 0
  %v29 = vcvt.s32.f32 %v27
  %v30 = vcvt.s32.f32 %v28
  %v31 = vld [vmem:[%s1] sm:$0x1]
  %v32 = vlaneseq
  %v33 = vshrl.u32 %v32, 7
  %v34 = vsub.s32 0, %v33
  %v35 = vrot.slane %v31, %v34
  %vm36 = vcmp.eq.s32.totalorder %v18, %v35
  %vm37 = vcmp.eq.s32.totalorder %v19, %v35
  %v38 = vsel %vm36, 1, 0
  %v39 = vsel %vm37, 1, 0
  %v40 = vcvt.s32.f32 %v38
  %v41 = vcvt.s32.f32 %v39
  %v42 = vld [vmem:[%s2] sm:$0xff]
  %v43 = vld [vmem:[%s2 + $0x8] sm:$0xff]
  %v44 = vld [vmem:[%s2 + $0x10] sm:$0xff]
  %v45 = vld [vmem:[%s2 + $0x18] sm:$0xff]
  %vm46 = vcmask 130048
  %v48 = vsel %vm46, %v42, 0
  %v51 = vsel %vm46, %v43, 0
  %v54 = vsel %vm46, %v44, 0
  %v57 = vsel %vm46, %v45, 0
  %59 = vmatprep.subr.mxu0 0.0
  %v60 = vand.u32 %v29, 4294901760
  %61 = vmatpush1.msra.mxu0 %v60
  %62 = vmatprep.subr.mxu0 0.0
  %v63 = vand.u32 %v30, 4294901760
  %64 = vmatpush1.msra.mxu0 %v63
  %65 = vmatprep.subr.mxu0 0.0
  %66 = vmatpush1.msra.mxu0 0.0
  %67 = vmatprep.subr.mxu0 0.0
  %68 = vmatpush1.msra.mxu0 0.0
  %69 = vmatprep.subr.mxu0 0.0
  %70 = vmatpush1.msra.mxu0 0.0
  %71 = vmatprep.subr.mxu0 0.0
  %72 = vmatpush1.msra.mxu0 0.0
  %73 = vmatprep.subr.mxu0 0.0
  %74 = vmatpush1.msra.mxu0 0.0
  %75 = vmatprep.subr.mxu0 0.0
  %76 = vmatpush1.msra.mxu0 0.0
  %77 = vmatprep.subr.mxu0 0.0
  %78 = vmatpush1.msra.mxu0 0.0
  %79 = vmatprep.subr.mxu0 0.0
  %80 = vmatpush1.msra.mxu0 0.0
  %81 = vmatprep.subr.mxu0 0.0
  %82 = vmatpush1.msra.mxu0 0.0
  %83 = vmatprep.subr.mxu0 0.0
  %84 = vmatpush1.msra.mxu0 0.0
  %85 = vmatprep.subr.mxu0 0.0
  %86 = vmatpush1.msra.mxu0 0.0
  %87 = vmatprep.subr.mxu0 0.0
  %88 = vmatpush1.msra.mxu0 0.0
  %89 = vmatprep.subr.mxu0 0.0
  %90 = vmatpush1.msra.mxu0 0.0
  %91 = vmatprep.subr.mxu0 0.0
  %92 = vmatpush1.msra.mxu0 0.0
  %93 = vmatprep.subr.mxu0 0.0
  %94 = vmatpush1.msra.mxu0 0.0
  %95 = vmatprep.subr.mxu0 0.0
  %96 = vmatpush1.msra.mxu0 0.0
  %97 = vmatprep.subr.mxu0 0.0
  %98 = vmatpush1.msra.mxu0 0.0
  %99 = vmatprep.subr.mxu0 0.0
  %100 = vmatpush1.msra.mxu0 0.0
  %101 = vmatprep.subr.mxu0 0.0
  %102 = vmatpush1.msra.mxu0 0.0
  %103 = vmatprep.subr.mxu0 0.0
  %104 = vmatpush1.msra.mxu0 0.0
  %105 = vmatprep.subr.mxu0 0.0
  %106 = vmatpush1.msra.mxu0 0.0
  %107 = vmatprep.subr.mxu0 0.0
  %108 = vmatpush1.msra.mxu0 0.0
  %109 = vmatprep.subr.mxu0 0.0
  %110 = vmatpush1.msra.mxu0 0.0
  %111 = vmatprep.subr.mxu0 0.0
  %112 = vmatpush1.msra.mxu0 0.0
  %113 = vmatprep.subr.mxu0 0.0
  %114 = vmatpush1.msra.mxu0 0.0
  %115 = vmatprep.subr.mxu0 0.0
  %116 = vmatpush1.msra.mxu0 0.0
  %117 = vmatprep.subr.mxu0 0.0
  %118 = vmatpush1.msra.mxu0 0.0
  %119 = vmatprep.subr.mxu0 0.0
  %120 = vmatpush1.msra.mxu0 0.0
  %121 = vmatprep.subr.mxu0 0.0
  %122 = vmatpush1.msra.mxu0 0.0
  %123 = vmatprep.subr.mxu0 0.0
  %124 = vmatpush1.msra.mxu0 0.0
  %125 = vmatprep.mubr.f32.mxu0 0.0
  %v126 = vand.u32 %v48, 4294901760
  %v127 = vsub.f32 %v48, %v126
  %v128 = vand.u32 %v127, 4294901760
  %v129 = vsub.f32 %v127, %v128
  %v130 = vand.u32 %v129, 4294901760
  %131 = vmatmul.mubr.f32.gmra.mrb[0].mxu0 %v130
  %v132 = vpop.f32.mrb[0].mxu0
  %v133 = vadd.f32 0.0, %v132
  %v134 = vpop.f32.mrb[0].mxu0
  %135 = vmatprep.mubr.f32.mxu0 0.0
  %v136 = vand.u32 %v51, 4294901760
  %v137 = vsub.f32 %v51, %v136
  %v138 = vand.u32 %v137, 4294901760
  %v139 = vsub.f32 %v137, %v138
  %v140 = vand.u32 %v139, 4294901760
  %141 = vmatmul.mubr.f32.gmra.mrb[0].mxu0 %v140
  %v142 = vpop.f32.mrb[0].mxu0
  %v143 = vadd.f32 0.0, %v142
  %v144 = vpop.f32.mrb[0].mxu0
  %145 = vmatprep.mubr.f32.mxu0 0.0
  %v146 = vand.u32 %v54, 4294901760
  %v147 = vsub.f32 %v54, %v146
  %v148 = vand.u32 %v147, 4294901760
  %v149 = vsub.f32 %v147, %v148
  %v150 = vand.u32 %v149, 4294901760
  %151 = vmatmul.mubr.f32.gmra.mrb[0].mxu0 %v150
  %v152 = vpop.f32.mrb[0].mxu0
  %v153 = vadd.f32 0.0, %v152
  %v154 = vpop.f32.mrb[0].mxu0
  %155 = vmatprep.mubr.f32.mxu0 0.0
  %v156 = vand.u32 %v57, 4294901760
  %v157 = vsub.f32 %v57, %v156
  %v158 = vand.u32 %v157, 4294901760
  %v159 = vsub.f32 %v157, %v158
  %v160 = vand.u32 %v159, 4294901760
  %161 = vmatmul.mubr.f32.gmra.mrb[0].mxu0 %v160
  %v162 = vpop.f32.mrb[0].mxu0
  %v163 = vadd.f32 0.0, %v162
  %v164 = vpop.f32.mrb[0].mxu0
  %165 = vdwg.mxu0
  %166 = vmatprep.subr.mxu0 0.0
  %v167 = vand.u32 %v29, 4294901760
  %v168 = vsub.f32 %v29, %v167
  %v169 = vand.u32 %v168, 4294901760
  %v170 = vsub.f32 %v168, %v169
  %v171 = vand.u32 %v170, 4294901760
  %172 = vmatpush1.msra.mxu0 %v171
  %173 = vmatprep.subr.mxu0 0.0
  %v174 = vand.u32 %v30, 4294901760
  %v175 = vsub.f32 %v30, %v174
  %v176 = vand.u32 %v175, 4294901760
  %v177 = vsub.f32 %v175, %v176
  %v178 = vand.u32 %v177, 4294901760
  %179 = vmatpush1.msra.mxu0 %v178
  %180 = vmatprep.subr.mxu0 0.0
  %181 = vmatpush1.msra.mxu0 0.0
  %182 = vmatprep.subr.mxu0 0.0
  %183 = vmatpush1.msra.mxu0 0.0
  %184 = vmatprep.subr.mxu0 0.0
  %185 = vmatpush1.msra.mxu0 0.0
  %186 = vmatprep.subr.mxu0 0.0
  %187 = vmatpush1.msra.mxu0 0.0
  %188 = vmatprep.subr.mxu0 0.0
  %189 = vmatpush1.msra.mxu0 0.0
  %190 = vmatprep.subr.mxu0 0.0
  %191 = vmatpush1.msra.mxu0 0.0
  %192 = vmatprep.subr.mxu0 0.0
  %193 = vmatpush1.msra.mxu0 0.0
  %194 = vmatprep.subr.mxu0 0.0
  %195 = vmatpush1.msra.mxu0 0.0
  %196 = vmatprep.subr.mxu0 0.0
  %197 = vmatpush1.msra.mxu0 0.0
  %198 = vmatprep.subr.mxu0 0.0
  %199 = vmatpush1.msra.mxu0 0.0
  %200 = vmatprep.subr.mxu0 0.0
  %201 = vmatpush1.msra.mxu0 0.0
  %202 = vmatprep.subr.mxu0 0.0
  %203 = vmatpush1.msra.mxu0 0.0
  %204 = vmatprep.subr.mxu0 0.0
  %205 = vmatpush1.msra.mxu0 0.0
  %206 = vmatprep.subr.mxu0 0.0
  %207 = vmatpush1.msra.mxu0 0.0
  %208 = vmatprep.subr.mxu0 0.0
  %209 = vmatpush1.msra.mxu0 0.0
  %210 = vmatprep.subr.mxu0 0.0
  %211 = vmatpush1.msra.mxu0 0.0
  %212 = vmatprep.subr.mxu0 0.0
  %213 = vmatpush1.msra.mxu0 0.0
  %214 = vmatprep.subr.mxu0 0.0
  %215 = vmatpush1.msra.mxu0 0.0
  %216 = vmatprep.subr.mxu0 0.0
  %217 = vmatpush1.msra.mxu0 0.0
  %218 = vmatprep.subr.mxu0 0.0
  %219 = vmatpush1.msra.mxu0 0.0
  %220 = vmatprep.subr.mxu0 0.0
  %221 = vmatpush1.msra.mxu0 0.0
  %222 = vmatprep.subr.mxu0 0.0
  %223 = vmatpush1.msra.mxu0 0.0
  %224 = vmatprep.subr.mxu0 0.0
  %225 = vmatpush1.msra.mxu0 0.0
  %226 = vmatprep.subr.mxu0 0.0
  %227 = vmatpush1.msra.mxu0 0.0
  %228 = vmatprep.subr.mxu0 0.0
  %229 = vmatpush1.msra.mxu0 0.0
  %230 = vmatprep.subr.mxu0 0.0
  %231 = vmatpush1.msra.mxu0 0.0
  %232 = vmatprep.subr.mxu0 0.0
  %233 = vmatpush1.msra.mxu0 0.0
  %234 = vmatprep.subr.mxu0 0.0
  %235 = vmatpush1.msra.mxu0 0.0
  %236 = vmatprep.subr.mxu0 0.0
  %237 = vmatpush1.msra.mxu0 0.0
  %238 = vmatprep.subr.mxu0 0.0
  %239 = vmatpush1.msra.mxu0 0.0
  %240 = vmatprep.mubr.f32.mxu0 0.0
  %v241 = vand.u32 %v48, 4294901760
  %242 = vmatmul.mubr.f32.gmra.mrb[0].mxu0 %v241
  %v243 = vpop.f32.mrb[0].mxu0
  %v244 = vadd.f32 %v133, %v243
  %v245 = vpop.f32.mrb[0].mxu0
  %246 = vmatprep.mubr.f32.mxu0 0.0
  %v247 = vand.u32 %v51, 4294901760
  %248 = vmatmul.mubr.f32.gmra.mrb[0].mxu0 %v247
  %v249 = vpop.f32.mrb[0].mxu0
  %v250 = vadd.f32 %v143, %v249
  %v251 = vpop.f32.mrb[0].mxu0
  %252 = vmatprep.mubr.f32.mxu0 0.0
  %v253 = vand.u32 %v54, 4294901760
  %254 = vmatmul.mubr.f32.gmra.mrb[0].mxu0 %v253
  %v255 = vpop.f32.mrb[0].mxu0
  %v256 = vadd.f32 %v153, %v255
  %v257 = vpop.f32.mrb[0].mxu0
  %258 = vmatprep.mubr.f32.mxu0 0.0
  %v259 = vand.u32 %v57, 4294901760
  %260 = vmatmul.mubr.f32.gmra.mrb[0].mxu0 %v259
  %v261 = vpop.f32.mrb[0].mxu0
  %v262 = vadd.f32 %v163, %v261
  %v263 = vpop.f32.mrb[0].mxu0
  %264 = vdwg.mxu0
  %265 = vmatprep.subr.mxu0 0.0
  %v266 = vand.u32 %v29, 4294901760
  %v267 = vsub.f32 %v29, %v266
  %268 = vmatpush1.msra.mxu0 %v267
  %269 = vmatprep.subr.mxu0 0.0
  %v270 = vand.u32 %v30, 4294901760
  %v271 = vsub.f32 %v30, %v270
  %272 = vmatpush1.msra.mxu0 %v271
  %273 = vmatprep.subr.mxu0 0.0
  %274 = vmatpush1.msra.mxu0 0.0
  %275 = vmatprep.subr.mxu0 0.0
  %276 = vmatpush1.msra.mxu0 0.0
  %277 = vmatprep.subr.mxu0 0.0
  %278 = vmatpush1.msra.mxu0 0.0
  %279 = vmatprep.subr.mxu0 0.0
  %280 = vmatpush1.msra.mxu0 0.0
  %281 = vmatprep.subr.mxu0 0.0
  %282 = vmatpush1.msra.mxu0 0.0
  %283 = vmatprep.subr.mxu0 0.0
  %284 = vmatpush1.msra.mxu0 0.0
  %285 = vmatprep.subr.mxu0 0.0
  %286 = vmatpush1.msra.mxu0 0.0
  %287 = vmatprep.subr.mxu0 0.0
  %288 = vmatpush1.msra.mxu0 0.0
  %289 = vmatprep.subr.mxu0 0.0
  %290 = vmatpush1.msra.mxu0 0.0
  %291 = vmatprep.subr.mxu0 0.0
  %292 = vmatpush1.msra.mxu0 0.0
  %293 = vmatprep.subr.mxu0 0.0
  %294 = vmatpush1.msra.mxu0 0.0
  %295 = vmatprep.subr.mxu0 0.0
  %296 = vmatpush1.msra.mxu0 0.0
  %297 = vmatprep.subr.mxu0 0.0
  %298 = vmatpush1.msra.mxu0 0.0
  %299 = vmatprep.subr.mxu0 0.0
  %300 = vmatpush1.msra.mxu0 0.0
  %301 = vmatprep.subr.mxu0 0.0
  %302 = vmatpush1.msra.mxu0 0.0
  %303 = vmatprep.subr.mxu0 0.0
  %304 = vmatpush1.msra.mxu0 0.0
  %305 = vmatprep.subr.mxu0 0.0
  %306 = vmatpush1.msra.mxu0 0.0
  %307 = vmatprep.subr.mxu0 0.0
  %308 = vmatpush1.msra.mxu0 0.0
  %309 = vmatprep.subr.mxu0 0.0
  %310 = vmatpush1.msra.mxu0 0.0
  %311 = vmatprep.subr.mxu0 0.0
  %312 = vmatpush1.msra.mxu0 0.0
  %313 = vmatprep.subr.mxu0 0.0
  %314 = vmatpush1.msra.mxu0 0.0
  %315 = vmatprep.subr.mxu0 0.0
  %316 = vmatpush1.msra.mxu0 0.0
  %317 = vmatprep.subr.mxu0 0.0
  %318 = vmatpush1.msra.mxu0 0.0
  %319 = vmatprep.subr.mxu0 0.0
  %320 = vmatpush1.msra.mxu0 0.0
  %321 = vmatprep.subr.mxu0 0.0
  %322 = vmatpush1.msra.mxu0 0.0
  %323 = vmatprep.subr.mxu0 0.0
  %324 = vmatpush1.msra.mxu0 0.0
  %325 = vmatprep.subr.mxu0 0.0
  %326 = vmatpush1.msra.mxu0 0.0
  %327 = vmatprep.subr.mxu0 0.0
  %328 = vmatpush1.msra.mxu0 0.0
  %329 = vmatprep.subr.mxu0 0.0
  %330 = vmatpush1.msra.mxu0 0.0
  %331 = vmatprep.subr.mxu0 0.0
  %332 = vmatpush1.msra.mxu0 0.0
  %333 = vmatprep.mubr.f32.mxu0 0.0
  %v334 = vand.u32 %v48, 4294901760
  %v335 = vsub.f32 %v48, %v334
  %336 = vmatmul.mubr.f32.gmra.mrb[0].mxu0 %v335
  %v337 = vpop.f32.mrb[0].mxu0
  %v338 = vadd.f32 %v244, %v337
  %v339 = vpop.f32.mrb[0].mxu0
  %340 = vmatprep.mubr.f32.mxu0 0.0
  %v341 = vand.u32 %v51, 4294901760
  %v342 = vsub.f32 %v51, %v341
  %343 = vmatmul.mubr.f32.gmra.mrb[0].mxu0 %v342
  %v344 = vpop.f32.mrb[0].mxu0
  %v345 = vadd.f32 %v250, %v344
  %v346 = vpop.f32.mrb[0].mxu0
  %347 = vmatprep.mubr.f32.mxu0 0.0
  %v348 = vand.u32 %v54, 4294901760
  %v349 = vsub.f32 %v54, %v348
  %350 = vmatmul.mubr.f32.gmra.mrb[0].mxu0 %v349
  %v351 = vpop.f32.mrb[0].mxu0
  %v352 = vadd.f32 %v256, %v351
  %v353 = vpop.f32.mrb[0].mxu0
  %354 = vmatprep.mubr.f32.mxu0 0.0
  %v355 = vand.u32 %v57, 4294901760
  %v356 = vsub.f32 %v57, %v355
  %357 = vmatmul.mubr.f32.gmra.mrb[0].mxu0 %v356
  %v358 = vpop.f32.mrb[0].mxu0
  %v359 = vadd.f32 %v262, %v358
  %v360 = vpop.f32.mrb[0].mxu0
  %361 = vdwg.mxu0
  %362 = vmatprep.subr.mxu0 0.0
  %v363 = vand.u32 %v29, 4294901760
  %364 = vmatpush1.msra.mxu0 %v363
  %365 = vmatprep.subr.mxu0 0.0
  %v366 = vand.u32 %v30, 4294901760
  %367 = vmatpush1.msra.mxu0 %v366
  %368 = vmatprep.subr.mxu0 0.0
  %369 = vmatpush1.msra.mxu0 0.0
  %370 = vmatprep.subr.mxu0 0.0
  %371 = vmatpush1.msra.mxu0 0.0
  %372 = vmatprep.subr.mxu0 0.0
  %373 = vmatpush1.msra.mxu0 0.0
  %374 = vmatprep.subr.mxu0 0.0
  %375 = vmatpush1.msra.mxu0 0.0
  %376 = vmatprep.subr.mxu0 0.0
  %377 = vmatpush1.msra.mxu0 0.0
  %378 = vmatprep.subr.mxu0 0.0
  %379 = vmatpush1.msra.mxu0 0.0
  %380 = vmatprep.subr.mxu0 0.0
  %381 = vmatpush1.msra.mxu0 0.0
  %382 = vmatprep.subr.mxu0 0.0
  %383 = vmatpush1.msra.mxu0 0.0
  %384 = vmatprep.subr.mxu0 0.0
  %385 = vmatpush1.msra.mxu0 0.0
  %386 = vmatprep.subr.mxu0 0.0
  %387 = vmatpush1.msra.mxu0 0.0
  %388 = vmatprep.subr.mxu0 0.0
  %389 = vmatpush1.msra.mxu0 0.0
  %390 = vmatprep.subr.mxu0 0.0
  %391 = vmatpush1.msra.mxu0 0.0
  %392 = vmatprep.subr.mxu0 0.0
  %393 = vmatpush1.msra.mxu0 0.0
  %394 = vmatprep.subr.mxu0 0.0
  %395 = vmatpush1.msra.mxu0 0.0
  %396 = vmatprep.subr.mxu0 0.0
  %397 = vmatpush1.msra.mxu0 0.0
  %398 = vmatprep.subr.mxu0 0.0
  %399 = vmatpush1.msra.mxu0 0.0
  %400 = vmatprep.subr.mxu0 0.0
  %401 = vmatpush1.msra.mxu0 0.0
  %402 = vmatprep.subr.mxu0 0.0
  %403 = vmatpush1.msra.mxu0 0.0
  %404 = vmatprep.subr.mxu0 0.0
  %405 = vmatpush1.msra.mxu0 0.0
  %406 = vmatprep.subr.mxu0 0.0
  %407 = vmatpush1.msra.mxu0 0.0
  %408 = vmatprep.subr.mxu0 0.0
  %409 = vmatpush1.msra.mxu0 0.0
  %410 = vmatprep.subr.mxu0 0.0
  %411 = vmatpush1.msra.mxu0 0.0
  %412 = vmatprep.subr.mxu0 0.0
  %413 = vmatpush1.msra.mxu0 0.0
  %414 = vmatprep.subr.mxu0 0.0
  %415 = vmatpush1.msra.mxu0 0.0
  %416 = vmatprep.subr.mxu0 0.0
  %417 = vmatpush1.msra.mxu0 0.0
  %418 = vmatprep.subr.mxu0 0.0
  %419 = vmatpush1.msra.mxu0 0.0
  %420 = vmatprep.subr.mxu0 0.0
  %421 = vmatpush1.msra.mxu0 0.0
  %422 = vmatprep.subr.mxu0 0.0
  %423 = vmatpush1.msra.mxu0 0.0
  %424 = vmatprep.subr.mxu0 0.0
  %425 = vmatpush1.msra.mxu0 0.0
  %426 = vmatprep.subr.mxu0 0.0
  %427 = vmatpush1.msra.mxu0 0.0
  %428 = vmatprep.mubr.f32.mxu0 0.0
  %v429 = vand.u32 %v48, 4294901760
  %v430 = vsub.f32 %v48, %v429
  %v431 = vand.u32 %v430, 4294901760
  %432 = vmatmul.mubr.f32.gmra.mrb[0].mxu0 %v431
  %v433 = vpop.f32.mrb[0].mxu0
  %v434 = vadd.f32 %v338, %v433
  %v435 = vpop.f32.mrb[0].mxu0
  %436 = vmatprep.mubr.f32.mxu0 0.0
  %v437 = vand.u32 %v51, 4294901760
  %v438 = vsub.f32 %v51, %v437
  %v439 = vand.u32 %v438, 4294901760
  %440 = vmatmul.mubr.f32.gmra.mrb[0].mxu0 %v439
  %v441 = vpop.f32.mrb[0].mxu0
  %v442 = vadd.f32 %v345, %v441
  %v443 = vpop.f32.mrb[0].mxu0
  %444 = vmatprep.mubr.f32.mxu0 0.0
  %v445 = vand.u32 %v54, 4294901760
  %v446 = vsub.f32 %v54, %v445
  %v447 = vand.u32 %v446, 4294901760
  %448 = vmatmul.mubr.f32.gmra.mrb[0].mxu0 %v447
  %v449 = vpop.f32.mrb[0].mxu0
  %v450 = vadd.f32 %v352, %v449
  %v451 = vpop.f32.mrb[0].mxu0
  %452 = vmatprep.mubr.f32.mxu0 0.0
  %v453 = vand.u32 %v57, 4294901760
  %v454 = vsub.f32 %v57, %v453
  %v455 = vand.u32 %v454, 4294901760
  %456 = vmatmul.mubr.f32.gmra.mrb[0].mxu0 %v455
  %v457 = vpop.f32.mrb[0].mxu0
  %v458 = vadd.f32 %v359, %v457
  %v459 = vpop.f32.mrb[0].mxu0
  %460 = vdwg.mxu0
  %461 = vmatprep.subr.mxu0 0.0
  %v462 = vand.u32 %v29, 4294901760
  %v463 = vsub.f32 %v29, %v462
  %v464 = vand.u32 %v463, 4294901760
  %465 = vmatpush1.msra.mxu0 %v464
  %466 = vmatprep.subr.mxu0 0.0
  %v467 = vand.u32 %v30, 4294901760
  %v468 = vsub.f32 %v30, %v467
  %v469 = vand.u32 %v468, 4294901760
  %470 = vmatpush1.msra.mxu0 %v469
  %471 = vmatprep.subr.mxu0 0.0
  %472 = vmatpush1.msra.mxu0 0.0
  %473 = vmatprep.subr.mxu0 0.0
  %474 = vmatpush1.msra.mxu0 0.0
  %475 = vmatprep.subr.mxu0 0.0
  %476 = vmatpush1.msra.mxu0 0.0
  %477 = vmatprep.subr.mxu0 0.0
  %478 = vmatpush1.msra.mxu0 0.0
  %479 = vmatprep.subr.mxu0 0.0
  %480 = vmatpush1.msra.mxu0 0.0
  %481 = vmatprep.subr.mxu0 0.0
  %482 = vmatpush1.msra.mxu0 0.0
  %483 = vmatprep.subr.mxu0 0.0
  %484 = vmatpush1.msra.mxu0 0.0
  %485 = vmatprep.subr.mxu0 0.0
  %486 = vmatpush1.msra.mxu0 0.0
  %487 = vmatprep.subr.mxu0 0.0
  %488 = vmatpush1.msra.mxu0 0.0
  %489 = vmatprep.subr.mxu0 0.0
  %490 = vmatpush1.msra.mxu0 0.0
  %491 = vmatprep.subr.mxu0 0.0
  %492 = vmatpush1.msra.mxu0 0.0
  %493 = vmatprep.subr.mxu0 0.0
  %494 = vmatpush1.msra.mxu0 0.0
  %495 = vmatprep.subr.mxu0 0.0
  %496 = vmatpush1.msra.mxu0 0.0
  %497 = vmatprep.subr.mxu0 0.0
  %498 = vmatpush1.msra.mxu0 0.0
  %499 = vmatprep.subr.mxu0 0.0
  %500 = vmatpush1.msra.mxu0 0.0
  %501 = vmatprep.subr.mxu0 0.0
  %502 = vmatpush1.msra.mxu0 0.0
  %503 = vmatprep.subr.mxu0 0.0
  %504 = vmatpush1.msra.mxu0 0.0
  %505 = vmatprep.subr.mxu0 0.0
  %506 = vmatpush1.msra.mxu0 0.0
  %507 = vmatprep.subr.mxu0 0.0
  %508 = vmatpush1.msra.mxu0 0.0
  %509 = vmatprep.subr.mxu0 0.0
  %510 = vmatpush1.msra.mxu0 0.0
  %511 = vmatprep.subr.mxu0 0.0
  %512 = vmatpush1.msra.mxu0 0.0
  %513 = vmatprep.subr.mxu0 0.0
  %514 = vmatpush1.msra.mxu0 0.0
  %515 = vmatprep.subr.mxu0 0.0
  %516 = vmatpush1.msra.mxu0 0.0
  %517 = vmatprep.subr.mxu0 0.0
  %518 = vmatpush1.msra.mxu0 0.0
  %519 = vmatprep.subr.mxu0 0.0
  %520 = vmatpush1.msra.mxu0 0.0
  %521 = vmatprep.subr.mxu0 0.0
  %522 = vmatpush1.msra.mxu0 0.0
  %523 = vmatprep.subr.mxu0 0.0
  %524 = vmatpush1.msra.mxu0 0.0
  %525 = vmatprep.subr.mxu0 0.0
  %526 = vmatpush1.msra.mxu0 0.0
  %527 = vmatprep.subr.mxu0 0.0
  %528 = vmatpush1.msra.mxu0 0.0
  %529 = vmatprep.subr.mxu0 0.0
  %530 = vmatpush1.msra.mxu0 0.0
  %531 = vmatprep.mubr.f32.mxu0 0.0
  %v532 = vand.u32 %v48, 4294901760
  %533 = vmatmul.mubr.f32.gmra.mrb[0].mxu0 %v532
  %v534 = vpop.f32.mrb[0].mxu0
  %v535 = vadd.f32 %v434, %v534
  %v536 = vpop.f32.mrb[0].mxu0
  %537 = vmatprep.mubr.f32.mxu0 0.0
  %v538 = vand.u32 %v51, 4294901760
  %539 = vmatmul.mubr.f32.gmra.mrb[0].mxu0 %v538
  %v540 = vpop.f32.mrb[0].mxu0
  %v541 = vadd.f32 %v442, %v540
  %v542 = vpop.f32.mrb[0].mxu0
  %543 = vmatprep.mubr.f32.mxu0 0.0
  %v544 = vand.u32 %v54, 4294901760
  %545 = vmatmul.mubr.f32.gmra.mrb[0].mxu0 %v544
  %v546 = vpop.f32.mrb[0].mxu0
  %v547 = vadd.f32 %v450, %v546
  %v548 = vpop.f32.mrb[0].mxu0
  %549 = vmatprep.mubr.f32.mxu0 0.0
  %v550 = vand.u32 %v57, 4294901760
  %551 = vmatmul.mubr.f32.gmra.mrb[0].mxu0 %v550
  %v552 = vpop.f32.mrb[0].mxu0
  %v553 = vadd.f32 %v458, %v552
  %v554 = vpop.f32.mrb[0].mxu0
  %555 = vdwg.mxu0
  %556 = vmatprep.subr.mxu0 0.0
  %v557 = vand.u32 %v29, 4294901760
  %558 = vmatpush1.msra.mxu0 %v557
  %559 = vmatprep.subr.mxu0 0.0
  %v560 = vand.u32 %v30, 4294901760
  %561 = vmatpush1.msra.mxu0 %v560
  %562 = vmatprep.subr.mxu0 0.0
  %563 = vmatpush1.msra.mxu0 0.0
  %564 = vmatprep.subr.mxu0 0.0
  %565 = vmatpush1.msra.mxu0 0.0
  %566 = vmatprep.subr.mxu0 0.0
  %567 = vmatpush1.msra.mxu0 0.0
  %568 = vmatprep.subr.mxu0 0.0
  %569 = vmatpush1.msra.mxu0 0.0
  %570 = vmatprep.subr.mxu0 0.0
  %571 = vmatpush1.msra.mxu0 0.0
  %572 = vmatprep.subr.mxu0 0.0
  %573 = vmatpush1.msra.mxu0 0.0
  %574 = vmatprep.subr.mxu0 0.0
  %575 = vmatpush1.msra.mxu0 0.0
  %576 = vmatprep.subr.mxu0 0.0
  %577 = vmatpush1.msra.mxu0 0.0
  %578 = vmatprep.subr.mxu0 0.0
  %579 = vmatpush1.msra.mxu0 0.0
  %580 = vmatprep.subr.mxu0 0.0
  %581 = vmatpush1.msra.mxu0 0.0
  %582 = vmatprep.subr.mxu0 0.0
  %583 = vmatpush1.msra.mxu0 0.0
  %584 = vmatprep.subr.mxu0 0.0
  %585 = vmatpush1.msra.mxu0 0.0
  %586 = vmatprep.subr.mxu0 0.0
  %587 = vmatpush1.msra.mxu0 0.0
  %588 = vmatprep.subr.mxu0 0.0
  %589 = vmatpush1.msra.mxu0 0.0
  %590 = vmatprep.subr.mxu0 0.0
  %591 = vmatpush1.msra.mxu0 0.0
  %592 = vmatprep.subr.mxu0 0.0
  %593 = vmatpush1.msra.mxu0 0.0
  %594 = vmatprep.subr.mxu0 0.0
  %595 = vmatpush1.msra.mxu0 0.0
  %596 = vmatprep.subr.mxu0 0.0
  %597 = vmatpush1.msra.mxu0 0.0
  %598 = vmatprep.subr.mxu0 0.0
  %599 = vmatpush1.msra.mxu0 0.0
  %600 = vmatprep.subr.mxu0 0.0
  %601 = vmatpush1.msra.mxu0 0.0
  %602 = vmatprep.subr.mxu0 0.0
  %603 = vmatpush1.msra.mxu0 0.0
  %604 = vmatprep.subr.mxu0 0.0
  %605 = vmatpush1.msra.mxu0 0.0
  %606 = vmatprep.subr.mxu0 0.0
  %607 = vmatpush1.msra.mxu0 0.0
  %608 = vmatprep.subr.mxu0 0.0
  %609 = vmatpush1.msra.mxu0 0.0
  %610 = vmatprep.subr.mxu0 0.0
  %611 = vmatpush1.msra.mxu0 0.0
  %612 = vmatprep.subr.mxu0 0.0
  %613 = vmatpush1.msra.mxu0 0.0
  %614 = vmatprep.subr.mxu0 0.0
  %615 = vmatpush1.msra.mxu0 0.0
  %616 = vmatprep.subr.mxu0 0.0
  %617 = vmatpush1.msra.mxu0 0.0
  %618 = vmatprep.subr.mxu0 0.0
  %619 = vmatpush1.msra.mxu0 0.0
  %620 = vmatprep.subr.mxu0 0.0
  %621 = vmatpush1.msra.mxu0 0.0
  %622 = vmatprep.mubr.f32.mxu0 0.0
  %v623 = vand.u32 %v48, 4294901760
  %624 = vmatmul.mubr.f32.gmra.mrb[0].mxu0 %v623
  %v625 = vpop.f32.mrb[0].mxu0
  %v626 = vadd.f32 %v535, %v625
  %v627 = vpop.f32.mrb[0].mxu0
  %628 = vmatprep.mubr.f32.mxu0 0.0
  %v629 = vand.u32 %v51, 4294901760
  %630 = vmatmul.mubr.f32.gmra.mrb[0].mxu0 %v629
  %v631 = vpop.f32.mrb[0].mxu0
  %v632 = vadd.f32 %v541, %v631
  %v633 = vpop.f32.mrb[0].mxu0
  %634 = vmatprep.mubr.f32.mxu0 0.0
  %v635 = vand.u32 %v54, 4294901760
  %636 = vmatmul.mubr.f32.gmra.mrb[0].mxu0 %v635
  %v637 = vpop.f32.mrb[0].mxu0
  %v638 = vadd.f32 %v547, %v637
  %v639 = vpop.f32.mrb[0].mxu0
  %640 = vmatprep.mubr.f32.mxu0 0.0
  %v641 = vand.u32 %v57, 4294901760
  %642 = vmatmul.mubr.f32.gmra.mrb[0].mxu0 %v641
  %v643 = vpop.f32.mrb[0].mxu0
  %v644 = vadd.f32 %v553, %v643
  %v645 = vpop.f32.mrb[0].mxu0
  %646 = vdwg.mxu0
  %v647 = vld [vmem:[%s3] sm:$0xff]
  %v648 = vld [vmem:[%s3 + $0x8] sm:$0xff]
  %v649 = vld [vmem:[%s3 + $0x10] sm:$0xff]
  %v650 = vld [vmem:[%s3 + $0x18] sm:$0xff]
  %v652 = vsel %vm46, %v647, 0
  %v655 = vsel %vm46, %v648, 0
  %v658 = vsel %vm46, %v649, 0
  %v661 = vsel %vm46, %v650, 0
  %663 = vmatprep.subr.mxu0 0.0
  %v664 = vand.u32 %v40, 4294901760
  %665 = vmatpush1.msra.mxu0 %v664
  %666 = vmatprep.subr.mxu0 0.0
  %v667 = vand.u32 %v41, 4294901760
  %668 = vmatpush1.msra.mxu0 %v667
  %669 = vmatprep.subr.mxu0 0.0
  %670 = vmatpush1.msra.mxu0 0.0
  %671 = vmatprep.subr.mxu0 0.0
  %672 = vmatpush1.msra.mxu0 0.0
  %673 = vmatprep.subr.mxu0 0.0
  %674 = vmatpush1.msra.mxu0 0.0
  %675 = vmatprep.subr.mxu0 0.0
  %676 = vmatpush1.msra.mxu0 0.0
  %677 = vmatprep.subr.mxu0 0.0
  %678 = vmatpush1.msra.mxu0 0.0
  %679 = vmatprep.subr.mxu0 0.0
  %680 = vmatpush1.msra.mxu0 0.0
  %681 = vmatprep.subr.mxu0 0.0
  %682 = vmatpush1.msra.mxu0 0.0
  %683 = vmatprep.subr.mxu0 0.0
  %684 = vmatpush1.msra.mxu0 0.0
  %685 = vmatprep.subr.mxu0 0.0
  %686 = vmatpush1.msra.mxu0 0.0
  %687 = vmatprep.subr.mxu0 0.0
  %688 = vmatpush1.msra.mxu0 0.0
  %689 = vmatprep.subr.mxu0 0.0
  %690 = vmatpush1.msra.mxu0 0.0
  %691 = vmatprep.subr.mxu0 0.0
  %692 = vmatpush1.msra.mxu0 0.0
  %693 = vmatprep.subr.mxu0 0.0
  %694 = vmatpush1.msra.mxu0 0.0
  %695 = vmatprep.subr.mxu0 0.0
  %696 = vmatpush1.msra.mxu0 0.0
  %697 = vmatprep.subr.mxu0 0.0
  %698 = vmatpush1.msra.mxu0 0.0
  %699 = vmatprep.subr.mxu0 0.0
  %700 = vmatpush1.msra.mxu0 0.0
  %701 = vmatprep.subr.mxu0 0.0
  %702 = vmatpush1.msra.mxu0 0.0
  %703 = vmatprep.subr.mxu0 0.0
  %704 = vmatpush1.msra.mxu0 0.0
  %705 = vmatprep.subr.mxu0 0.0
  %706 = vmatpush1.msra.mxu0 0.0
  %707 = vmatprep.subr.mxu0 0.0
  %708 = vmatpush1.msra.mxu0 0.0
  %709 = vmatprep.subr.mxu0 0.0
  %710 = vmatpush1.msra.mxu0 0.0
  %711 = vmatprep.subr.mxu0 0.0
  %712 = vmatpush1.msra.mxu0 0.0
  %713 = vmatprep.subr.mxu0 0.0
  %714 = vmatpush1.msra.mxu0 0.0
  %715 = vmatprep.subr.mxu0 0.0
  %716 = vmatpush1.msra.mxu0 0.0
  %717 = vmatprep.subr.mxu0 0.0
  %718 = vmatpush1.msra.mxu0 0.0
  %719 = vmatprep.subr.mxu0 0.0
  %720 = vmatpush1.msra.mxu0 0.0
  %721 = vmatprep.subr.mxu0 0.0
  %722 = vmatpush1.msra.mxu0 0.0
  %723 = vmatprep.subr.mxu0 0.0
  %724 = vmatpush1.msra.mxu0 0.0
  %725 = vmatprep.subr.mxu0 0.0
  %726 = vmatpush1.msra.mxu0 0.0
  %727 = vmatprep.subr.mxu0 0.0
  %728 = vmatpush1.msra.mxu0 0.0
  %729 = vmatprep.mubr.f32.mxu0 0.0
  %v730 = vand.u32 %v652, 4294901760
  %v731 = vsub.f32 %v652, %v730
  %v732 = vand.u32 %v731, 4294901760
  %v733 = vsub.f32 %v731, %v732
  %v734 = vand.u32 %v733, 4294901760
  %735 = vmatmul.mubr.f32.gmra.mrb[0].mxu0 %v734
  %v736 = vpop.f32.mrb[0].mxu0
  %v737 = vadd.f32 0.0, %v736
  %v738 = vpop.f32.mrb[0].mxu0
  %739 = vmatprep.mubr.f32.mxu0 0.0
  %v740 = vand.u32 %v655, 4294901760
  %v741 = vsub.f32 %v655, %v740
  %v742 = vand.u32 %v741, 4294901760
  %v743 = vsub.f32 %v741, %v742
  %v744 = vand.u32 %v743, 4294901760
  %745 = vmatmul.mubr.f32.gmra.mrb[0].mxu0 %v744
  %v746 = vpop.f32.mrb[0].mxu0
  %v747 = vadd.f32 0.0, %v746
  %v748 = vpop.f32.mrb[0].mxu0
  %749 = vmatprep.mubr.f32.mxu0 0.0
  %v750 = vand.u32 %v658, 4294901760
  %v751 = vsub.f32 %v658, %v750
  %v752 = vand.u32 %v751, 4294901760
  %v753 = vsub.f32 %v751, %v752
  %v754 = vand.u32 %v753, 4294901760
  %755 = vmatmul.mubr.f32.gmra.mrb[0].mxu0 %v754
  %v756 = vpop.f32.mrb[0].mxu0
  %v757 = vadd.f32 0.0, %v756
  %v758 = vpop.f32.mrb[0].mxu0
  %759 = vmatprep.mubr.f32.mxu0 0.0
  %v760 = vand.u32 %v661, 4294901760
  %v761 = vsub.f32 %v661, %v760
  %v762 = vand.u32 %v761, 4294901760
  %v763 = vsub.f32 %v761, %v762
  %v764 = vand.u32 %v763, 4294901760
  %765 = vmatmul.mubr.f32.gmra.mrb[0].mxu0 %v764
  %v766 = vpop.f32.mrb[0].mxu0
  %v767 = vadd.f32 0.0, %v766
  %v768 = vpop.f32.mrb[0].mxu0
  %769 = vdwg.mxu0
  %770 = vmatprep.subr.mxu0 0.0
  %v771 = vand.u32 %v40, 4294901760
  %v772 = vsub.f32 %v40, %v771
  %v773 = vand.u32 %v772, 4294901760
  %v774 = vsub.f32 %v772, %v773
  %v775 = vand.u32 %v774, 4294901760
  %776 = vmatpush1.msra.mxu0 %v775
  %777 = vmatprep.subr.mxu0 0.0
  %v778 = vand.u32 %v41, 4294901760
  %v779 = vsub.f32 %v41, %v778
  %v780 = vand.u32 %v779, 4294901760
  %v781 = vsub.f32 %v779, %v780
  %v782 = vand.u32 %v781, 4294901760
  %783 = vmatpush1.msra.mxu0 %v782
  %784 = vmatprep.subr.mxu0 0.0
  %785 = vmatpush1.msra.mxu0 0.0
  %786 = vmatprep.subr.mxu0 0.0
  %787 = vmatpush1.msra.mxu0 0.0
  %788 = vmatprep.subr.mxu0 0.0
  %789 = vmatpush1.msra.mxu0 0.0
  %790 = vmatprep.subr.mxu0 0.0
  %791 = vmatpush1.msra.mxu0 0.0
  %792 = vmatprep.subr.mxu0 0.0
  %793 = vmatpush1.msra.mxu0 0.0
  %794 = vmatprep.subr.mxu0 0.0
  %795 = vmatpush1.msra.mxu0 0.0
  %796 = vmatprep.subr.mxu0 0.0
  %797 = vmatpush1.msra.mxu0 0.0
  %798 = vmatprep.subr.mxu0 0.0
  %799 = vmatpush1.msra.mxu0 0.0
  %800 = vmatprep.subr.mxu0 0.0
  %801 = vmatpush1.msra.mxu0 0.0
  %802 = vmatprep.subr.mxu0 0.0
  %803 = vmatpush1.msra.mxu0 0.0
  %804 = vmatprep.subr.mxu0 0.0
  %805 = vmatpush1.msra.mxu0 0.0
  %806 = vmatprep.subr.mxu0 0.0
  %807 = vmatpush1.msra.mxu0 0.0
  %808 = vmatprep.subr.mxu0 0.0
  %809 = vmatpush1.msra.mxu0 0.0
  %810 = vmatprep.subr.mxu0 0.0
  %811 = vmatpush1.msra.mxu0 0.0
  %812 = vmatprep.subr.mxu0 0.0
  %813 = vmatpush1.msra.mxu0 0.0
  %814 = vmatprep.subr.mxu0 0.0
  %815 = vmatpush1.msra.mxu0 0.0
  %816 = vmatprep.subr.mxu0 0.0
  %817 = vmatpush1.msra.mxu0 0.0
  %818 = vmatprep.subr.mxu0 0.0
  %819 = vmatpush1.msra.mxu0 0.0
  %820 = vmatprep.subr.mxu0 0.0
  %821 = vmatpush1.msra.mxu0 0.0
  %822 = vmatprep.subr.mxu0 0.0
  %823 = vmatpush1.msra.mxu0 0.0
  %824 = vmatprep.subr.mxu0 0.0
  %825 = vmatpush1.msra.mxu0 0.0
  %826 = vmatprep.subr.mxu0 0.0
  %827 = vmatpush1.msra.mxu0 0.0
  %828 = vmatprep.subr.mxu0 0.0
  %829 = vmatpush1.msra.mxu0 0.0
  %830 = vmatprep.subr.mxu0 0.0
  %831 = vmatpush1.msra.mxu0 0.0
  %832 = vmatprep.subr.mxu0 0.0
  %833 = vmatpush1.msra.mxu0 0.0
  %834 = vmatprep.subr.mxu0 0.0
  %835 = vmatpush1.msra.mxu0 0.0
  %836 = vmatprep.subr.mxu0 0.0
  %837 = vmatpush1.msra.mxu0 0.0
  %838 = vmatprep.subr.mxu0 0.0
  %839 = vmatpush1.msra.mxu0 0.0
  %840 = vmatprep.subr.mxu0 0.0
  %841 = vmatpush1.msra.mxu0 0.0
  %842 = vmatprep.subr.mxu0 0.0
  %843 = vmatpush1.msra.mxu0 0.0
  %844 = vmatprep.mubr.f32.mxu0 0.0
  %v845 = vand.u32 %v652, 4294901760
  %846 = vmatmul.mubr.f32.gmra.mrb[0].mxu0 %v845
  %v847 = vpop.f32.mrb[0].mxu0
  %v848 = vadd.f32 %v737, %v847
  %v849 = vpop.f32.mrb[0].mxu0
  %850 = vmatprep.mubr.f32.mxu0 0.0
  %v851 = vand.u32 %v655, 4294901760
  %852 = vmatmul.mubr.f32.gmra.mrb[0].mxu0 %v851
  %v853 = vpop.f32.mrb[0].mxu0
  %v854 = vadd.f32 %v747, %v853
  %v855 = vpop.f32.mrb[0].mxu0
  %856 = vmatprep.mubr.f32.mxu0 0.0
  %v857 = vand.u32 %v658, 4294901760
  %858 = vmatmul.mubr.f32.gmra.mrb[0].mxu0 %v857
  %v859 = vpop.f32.mrb[0].mxu0
  %v860 = vadd.f32 %v757, %v859
  %v861 = vpop.f32.mrb[0].mxu0
  %862 = vmatprep.mubr.f32.mxu0 0.0
  %v863 = vand.u32 %v661, 4294901760
  %864 = vmatmul.mubr.f32.gmra.mrb[0].mxu0 %v863
  %v865 = vpop.f32.mrb[0].mxu0
  %v866 = vadd.f32 %v767, %v865
  %v867 = vpop.f32.mrb[0].mxu0
  %868 = vdwg.mxu0
  %869 = vmatprep.subr.mxu0 0.0
  %v870 = vand.u32 %v40, 4294901760
  %v871 = vsub.f32 %v40, %v870
  %872 = vmatpush1.msra.mxu0 %v871
  %873 = vmatprep.subr.mxu0 0.0
  %v874 = vand.u32 %v41, 4294901760
  %v875 = vsub.f32 %v41, %v874
  %876 = vmatpush1.msra.mxu0 %v875
  %877 = vmatprep.subr.mxu0 0.0
  %878 = vmatpush1.msra.mxu0 0.0
  %879 = vmatprep.subr.mxu0 0.0
  %880 = vmatpush1.msra.mxu0 0.0
  %881 = vmatprep.subr.mxu0 0.0
  %882 = vmatpush1.msra.mxu0 0.0
  %883 = vmatprep.subr.mxu0 0.0
  %884 = vmatpush1.msra.mxu0 0.0
  %885 = vmatprep.subr.mxu0 0.0
  %886 = vmatpush1.msra.mxu0 0.0
  %887 = vmatprep.subr.mxu0 0.0
  %888 = vmatpush1.msra.mxu0 0.0
  %889 = vmatprep.subr.mxu0 0.0
  %890 = vmatpush1.msra.mxu0 0.0
  %891 = vmatprep.subr.mxu0 0.0
  %892 = vmatpush1.msra.mxu0 0.0
  %893 = vmatprep.subr.mxu0 0.0
  %894 = vmatpush1.msra.mxu0 0.0
  %895 = vmatprep.subr.mxu0 0.0
  %896 = vmatpush1.msra.mxu0 0.0
  %897 = vmatprep.subr.mxu0 0.0
  %898 = vmatpush1.msra.mxu0 0.0
  %899 = vmatprep.subr.mxu0 0.0
  %900 = vmatpush1.msra.mxu0 0.0
  %901 = vmatprep.subr.mxu0 0.0
  %902 = vmatpush1.msra.mxu0 0.0
  %903 = vmatprep.subr.mxu0 0.0
  %904 = vmatpush1.msra.mxu0 0.0
  %905 = vmatprep.subr.mxu0 0.0
  %906 = vmatpush1.msra.mxu0 0.0
  %907 = vmatprep.subr.mxu0 0.0
  %908 = vmatpush1.msra.mxu0 0.0
  %909 = vmatprep.subr.mxu0 0.0
  %910 = vmatpush1.msra.mxu0 0.0
  %911 = vmatprep.subr.mxu0 0.0
  %912 = vmatpush1.msra.mxu0 0.0
  %913 = vmatprep.subr.mxu0 0.0
  %914 = vmatpush1.msra.mxu0 0.0
  %915 = vmatprep.subr.mxu0 0.0
  %916 = vmatpush1.msra.mxu0 0.0
  %917 = vmatprep.subr.mxu0 0.0
  %918 = vmatpush1.msra.mxu0 0.0
  %919 = vmatprep.subr.mxu0 0.0
  %920 = vmatpush1.msra.mxu0 0.0
  %921 = vmatprep.subr.mxu0 0.0
  %922 = vmatpush1.msra.mxu0 0.0
  %923 = vmatprep.subr.mxu0 0.0
  %924 = vmatpush1.msra.mxu0 0.0
  %925 = vmatprep.subr.mxu0 0.0
  %926 = vmatpush1.msra.mxu0 0.0
  %927 = vmatprep.subr.mxu0 0.0
  %928 = vmatpush1.msra.mxu0 0.0
  %929 = vmatprep.subr.mxu0 0.0
  %930 = vmatpush1.msra.mxu0 0.0
  %931 = vmatprep.subr.mxu0 0.0
  %932 = vmatpush1.msra.mxu0 0.0
  %933 = vmatprep.subr.mxu0 0.0
  %934 = vmatpush1.msra.mxu0 0.0
  %935 = vmatprep.subr.mxu0 0.0
  %936 = vmatpush1.msra.mxu0 0.0
  %937 = vmatprep.mubr.f32.mxu0 0.0
  %v938 = vand.u32 %v652, 4294901760
  %v939 = vsub.f32 %v652, %v938
  %940 = vmatmul.mubr.f32.gmra.mrb[0].mxu0 %v939
  %v941 = vpop.f32.mrb[0].mxu0
  %v942 = vadd.f32 %v848, %v941
  %v943 = vpop.f32.mrb[0].mxu0
  %944 = vmatprep.mubr.f32.mxu0 0.0
  %v945 = vand.u32 %v655, 4294901760
  %v946 = vsub.f32 %v655, %v945
  %947 = vmatmul.mubr.f32.gmra.mrb[0].mxu0 %v946
  %v948 = vpop.f32.mrb[0].mxu0
  %v949 = vadd.f32 %v854, %v948
  %v950 = vpop.f32.mrb[0].mxu0
  %951 = vmatprep.mubr.f32.mxu0 0.0
  %v952 = vand.u32 %v658, 4294901760
  %v953 = vsub.f32 %v658, %v952
  %954 = vmatmul.mubr.f32.gmra.mrb[0].mxu0 %v953
  %v955 = vpop.f32.mrb[0].mxu0
  %v956 = vadd.f32 %v860, %v955
  %v957 = vpop.f32.mrb[0].mxu0
  %958 = vmatprep.mubr.f32.mxu0 0.0
  %v959 = vand.u32 %v661, 4294901760
  %v960 = vsub.f32 %v661, %v959
  %961 = vmatmul.mubr.f32.gmra.mrb[0].mxu0 %v960
  %v962 = vpop.f32.mrb[0].mxu0
  %v963 = vadd.f32 %v866, %v962
  %v964 = vpop.f32.mrb[0].mxu0
  %965 = vdwg.mxu0
  %966 = vmatprep.subr.mxu0 0.0
  %v967 = vand.u32 %v40, 4294901760
  %968 = vmatpush1.msra.mxu0 %v967
  %969 = vmatprep.subr.mxu0 0.0
  %v970 = vand.u32 %v41, 4294901760
  %971 = vmatpush1.msra.mxu0 %v970
  %972 = vmatprep.subr.mxu0 0.0
  %973 = vmatpush1.msra.mxu0 0.0
  %974 = vmatprep.subr.mxu0 0.0
  %975 = vmatpush1.msra.mxu0 0.0
  %976 = vmatprep.subr.mxu0 0.0
  %977 = vmatpush1.msra.mxu0 0.0
  %978 = vmatprep.subr.mxu0 0.0
  %979 = vmatpush1.msra.mxu0 0.0
  %980 = vmatprep.subr.mxu0 0.0
  %981 = vmatpush1.msra.mxu0 0.0
  %982 = vmatprep.subr.mxu0 0.0
  %983 = vmatpush1.msra.mxu0 0.0
  %984 = vmatprep.subr.mxu0 0.0
  %985 = vmatpush1.msra.mxu0 0.0
  %986 = vmatprep.subr.mxu0 0.0
  %987 = vmatpush1.msra.mxu0 0.0
  %988 = vmatprep.subr.mxu0 0.0
  %989 = vmatpush1.msra.mxu0 0.0
  %990 = vmatprep.subr.mxu0 0.0
  %991 = vmatpush1.msra.mxu0 0.0
  %992 = vmatprep.subr.mxu0 0.0
  %993 = vmatpush1.msra.mxu0 0.0
  %994 = vmatprep.subr.mxu0 0.0
  %995 = vmatpush1.msra.mxu0 0.0
  %996 = vmatprep.subr.mxu0 0.0
  %997 = vmatpush1.msra.mxu0 0.0
  %998 = vmatprep.subr.mxu0 0.0
  %999 = vmatpush1.msra.mxu0 0.0
  %1000 = vmatprep.subr.mxu0 0.0
  %1001 = vmatpush1.msra.mxu0 0.0
  %1002 = vmatprep.subr.mxu0 0.0
  %1003 = vmatpush1.msra.mxu0 0.0
  %1004 = vmatprep.subr.mxu0 0.0
  %1005 = vmatpush1.msra.mxu0 0.0
  %1006 = vmatprep.subr.mxu0 0.0
  %1007 = vmatpush1.msra.mxu0 0.0
  %1008 = vmatprep.subr.mxu0 0.0
  %1009 = vmatpush1.msra.mxu0 0.0
  %1010 = vmatprep.subr.mxu0 0.0
  %1011 = vmatpush1.msra.mxu0 0.0
  %1012 = vmatprep.subr.mxu0 0.0
  %1013 = vmatpush1.msra.mxu0 0.0
  %1014 = vmatprep.subr.mxu0 0.0
  %1015 = vmatpush1.msra.mxu0 0.0
  %1016 = vmatprep.subr.mxu0 0.0
  %1017 = vmatpush1.msra.mxu0 0.0
  %1018 = vmatprep.subr.mxu0 0.0
  %1019 = vmatpush1.msra.mxu0 0.0
  %1020 = vmatprep.subr.mxu0 0.0
  %1021 = vmatpush1.msra.mxu0 0.0
  %1022 = vmatprep.subr.mxu0 0.0
  %1023 = vmatpush1.msra.mxu0 0.0
  %1024 = vmatprep.subr.mxu0 0.0
  %1025 = vmatpush1.msra.mxu0 0.0
  %1026 = vmatprep.subr.mxu0 0.0
  %1027 = vmatpush1.msra.mxu0 0.0
  %1028 = vmatprep.subr.mxu0 0.0
  %1029 = vmatpush1.msra.mxu0 0.0
  %1030 = vmatprep.subr.mxu0 0.0
  %1031 = vmatpush1.msra.mxu0 0.0
  %1032 = vmatprep.mubr.f32.mxu0 0.0
  %v1033 = vand.u32 %v652, 4294901760
  %v1034 = vsub.f32 %v652, %v1033
  %v1035 = vand.u32 %v1034, 4294901760
  %1036 = vmatmul.mubr.f32.gmra.mrb[0].mxu0 %v1035
  %v1037 = vpop.f32.mrb[0].mxu0
  %v1038 = vadd.f32 %v942, %v1037
  %v1039 = vpop.f32.mrb[0].mxu0
  %1040 = vmatprep.mubr.f32.mxu0 0.0
  %v1041 = vand.u32 %v655, 4294901760
  %v1042 = vsub.f32 %v655, %v1041
  %v1043 = vand.u32 %v1042, 4294901760
  %1044 = vmatmul.mubr.f32.gmra.mrb[0].mxu0 %v1043
  %v1045 = vpop.f32.mrb[0].mxu0
  %v1046 = vadd.f32 %v949, %v1045
  %v1047 = vpop.f32.mrb[0].mxu0
  %1048 = vmatprep.mubr.f32.mxu0 0.0
  %v1049 = vand.u32 %v658, 4294901760
  %v1050 = vsub.f32 %v658, %v1049
  %v1051 = vand.u32 %v1050, 4294901760
  %1052 = vmatmul.mubr.f32.gmra.mrb[0].mxu0 %v1051
  %v1053 = vpop.f32.mrb[0].mxu0
  %v1054 = vadd.f32 %v956, %v1053
  %v1055 = vpop.f32.mrb[0].mxu0
  %1056 = vmatprep.mubr.f32.mxu0 0.0
  %v1057 = vand.u32 %v661, 4294901760
  %v1058 = vsub.f32 %v661, %v1057
  %v1059 = vand.u32 %v1058, 4294901760
  %1060 = vmatmul.mubr.f32.gmra.mrb[0].mxu0 %v1059
  %v1061 = vpop.f32.mrb[0].mxu0
  %v1062 = vadd.f32 %v963, %v1061
  %v1063 = vpop.f32.mrb[0].mxu0
  %1064 = vdwg.mxu0
  %1065 = vmatprep.subr.mxu0 0.0
  %v1066 = vand.u32 %v40, 4294901760
  %v1067 = vsub.f32 %v40, %v1066
  %v1068 = vand.u32 %v1067, 4294901760
  %1069 = vmatpush1.msra.mxu0 %v1068
  %1070 = vmatprep.subr.mxu0 0.0
  %v1071 = vand.u32 %v41, 4294901760
  %v1072 = vsub.f32 %v41, %v1071
  %v1073 = vand.u32 %v1072, 4294901760
  %1074 = vmatpush1.msra.mxu0 %v1073
  %1075 = vmatprep.subr.mxu0 0.0
  %1076 = vmatpush1.msra.mxu0 0.0
  %1077 = vmatprep.subr.mxu0 0.0
  %1078 = vmatpush1.msra.mxu0 0.0
  %1079 = vmatprep.subr.mxu0 0.0
  %1080 = vmatpush1.msra.mxu0 0.0
  %1081 = vmatprep.subr.mxu0 0.0
  %1082 = vmatpush1.msra.mxu0 0.0
  %1083 = vmatprep.subr.mxu0 0.0
  %1084 = vmatpush1.msra.mxu0 0.0
  %1085 = vmatprep.subr.mxu0 0.0
  %1086 = vmatpush1.msra.mxu0 0.0
  %1087 = vmatprep.subr.mxu0 0.0
  %1088 = vmatpush1.msra.mxu0 0.0
  %1089 = vmatprep.subr.mxu0 0.0
  %1090 = vmatpush1.msra.mxu0 0.0
  %1091 = vmatprep.subr.mxu0 0.0
  %1092 = vmatpush1.msra.mxu0 0.0
  %1093 = vmatprep.subr.mxu0 0.0
  %1094 = vmatpush1.msra.mxu0 0.0
  %1095 = vmatprep.subr.mxu0 0.0
  %1096 = vmatpush1.msra.mxu0 0.0
  %1097 = vmatprep.subr.mxu0 0.0
  %1098 = vmatpush1.msra.mxu0 0.0
  %1099 = vmatprep.subr.mxu0 0.0
  %1100 = vmatpush1.msra.mxu0 0.0
  %1101 = vmatprep.subr.mxu0 0.0
  %1102 = vmatpush1.msra.mxu0 0.0
  %1103 = vmatprep.subr.mxu0 0.0
  %1104 = vmatpush1.msra.mxu0 0.0
  %1105 = vmatprep.subr.mxu0 0.0
  %1106 = vmatpush1.msra.mxu0 0.0
  %1107 = vmatprep.subr.mxu0 0.0
  %1108 = vmatpush1.msra.mxu0 0.0
  %1109 = vmatprep.subr.mxu0 0.0
  %1110 = vmatpush1.msra.mxu0 0.0
  %1111 = vmatprep.subr.mxu0 0.0
  %1112 = vmatpush1.msra.mxu0 0.0
  %1113 = vmatprep.subr.mxu0 0.0
  %1114 = vmatpush1.msra.mxu0 0.0
  %1115 = vmatprep.subr.mxu0 0.0
  %1116 = vmatpush1.msra.mxu0 0.0
  %1117 = vmatprep.subr.mxu0 0.0
  %1118 = vmatpush1.msra.mxu0 0.0
  %1119 = vmatprep.subr.mxu0 0.0
  %1120 = vmatpush1.msra.mxu0 0.0
  %1121 = vmatprep.subr.mxu0 0.0
  %1122 = vmatpush1.msra.mxu0 0.0
  %1123 = vmatprep.subr.mxu0 0.0
  %1124 = vmatpush1.msra.mxu0 0.0
  %1125 = vmatprep.subr.mxu0 0.0
  %1126 = vmatpush1.msra.mxu0 0.0
  %1127 = vmatprep.subr.mxu0 0.0
  %1128 = vmatpush1.msra.mxu0 0.0
  %1129 = vmatprep.subr.mxu0 0.0
  %1130 = vmatpush1.msra.mxu0 0.0
  %1131 = vmatprep.subr.mxu0 0.0
  %1132 = vmatpush1.msra.mxu0 0.0
  %1133 = vmatprep.subr.mxu0 0.0
  %1134 = vmatpush1.msra.mxu0 0.0
  %1135 = vmatprep.mubr.f32.mxu0 0.0
  %v1136 = vand.u32 %v652, 4294901760
  %1137 = vmatmul.mubr.f32.gmra.mrb[0].mxu0 %v1136
  %v1138 = vpop.f32.mrb[0].mxu0
  %v1139 = vadd.f32 %v1038, %v1138
  %v1140 = vpop.f32.mrb[0].mxu0
  %1141 = vmatprep.mubr.f32.mxu0 0.0
  %v1142 = vand.u32 %v655, 4294901760
  %1143 = vmatmul.mubr.f32.gmra.mrb[0].mxu0 %v1142
  %v1144 = vpop.f32.mrb[0].mxu0
  %v1145 = vadd.f32 %v1046, %v1144
  %v1146 = vpop.f32.mrb[0].mxu0
  %1147 = vmatprep.mubr.f32.mxu0 0.0
  %v1148 = vand.u32 %v658, 4294901760
  %1149 = vmatmul.mubr.f32.gmra.mrb[0].mxu0 %v1148
  %v1150 = vpop.f32.mrb[0].mxu0
  %v1151 = vadd.f32 %v1054, %v1150
  %v1152 = vpop.f32.mrb[0].mxu0
  %1153 = vmatprep.mubr.f32.mxu0 0.0
  %v1154 = vand.u32 %v661, 4294901760
  %1155 = vmatmul.mubr.f32.gmra.mrb[0].mxu0 %v1154
  %v1156 = vpop.f32.mrb[0].mxu0
  %v1157 = vadd.f32 %v1062, %v1156
  %v1158 = vpop.f32.mrb[0].mxu0
  %1159 = vdwg.mxu0
  %1160 = vmatprep.subr.mxu0 0.0
  %v1161 = vand.u32 %v40, 4294901760
  %1162 = vmatpush1.msra.mxu0 %v1161
  %1163 = vmatprep.subr.mxu0 0.0
  %v1164 = vand.u32 %v41, 4294901760
  %1165 = vmatpush1.msra.mxu0 %v1164
  %1166 = vmatprep.subr.mxu0 0.0
  %1167 = vmatpush1.msra.mxu0 0.0
  %1168 = vmatprep.subr.mxu0 0.0
  %1169 = vmatpush1.msra.mxu0 0.0
  %1170 = vmatprep.subr.mxu0 0.0
  %1171 = vmatpush1.msra.mxu0 0.0
  %1172 = vmatprep.subr.mxu0 0.0
  %1173 = vmatpush1.msra.mxu0 0.0
  %1174 = vmatprep.subr.mxu0 0.0
  %1175 = vmatpush1.msra.mxu0 0.0
  %1176 = vmatprep.subr.mxu0 0.0
  %1177 = vmatpush1.msra.mxu0 0.0
  %1178 = vmatprep.subr.mxu0 0.0
  %1179 = vmatpush1.msra.mxu0 0.0
  %1180 = vmatprep.subr.mxu0 0.0
  %1181 = vmatpush1.msra.mxu0 0.0
  %1182 = vmatprep.subr.mxu0 0.0
  %1183 = vmatpush1.msra.mxu0 0.0
  %1184 = vmatprep.subr.mxu0 0.0
  %1185 = vmatpush1.msra.mxu0 0.0
  %1186 = vmatprep.subr.mxu0 0.0
  %1187 = vmatpush1.msra.mxu0 0.0
  %1188 = vmatprep.subr.mxu0 0.0
  %1189 = vmatpush1.msra.mxu0 0.0
  %1190 = vmatprep.subr.mxu0 0.0
  %1191 = vmatpush1.msra.mxu0 0.0
  %1192 = vmatprep.subr.mxu0 0.0
  %1193 = vmatpush1.msra.mxu0 0.0
  %1194 = vmatprep.subr.mxu0 0.0
  %1195 = vmatpush1.msra.mxu0 0.0
  %1196 = vmatprep.subr.mxu0 0.0
  %1197 = vmatpush1.msra.mxu0 0.0
  %1198 = vmatprep.subr.mxu0 0.0
  %1199 = vmatpush1.msra.mxu0 0.0
  %1200 = vmatprep.subr.mxu0 0.0
  %1201 = vmatpush1.msra.mxu0 0.0
  %1202 = vmatprep.subr.mxu0 0.0
  %1203 = vmatpush1.msra.mxu0 0.0
  %1204 = vmatprep.subr.mxu0 0.0
  %1205 = vmatpush1.msra.mxu0 0.0
  %1206 = vmatprep.subr.mxu0 0.0
  %1207 = vmatpush1.msra.mxu0 0.0
  %1208 = vmatprep.subr.mxu0 0.0
  %1209 = vmatpush1.msra.mxu0 0.0
  %1210 = vmatprep.subr.mxu0 0.0
  %1211 = vmatpush1.msra.mxu0 0.0
  %1212 = vmatprep.subr.mxu0 0.0
  %1213 = vmatpush1.msra.mxu0 0.0
  %1214 = vmatprep.subr.mxu0 0.0
  %1215 = vmatpush1.msra.mxu0 0.0
  %1216 = vmatprep.subr.mxu0 0.0
  %1217 = vmatpush1.msra.mxu0 0.0
  %1218 = vmatprep.subr.mxu0 0.0
  %1219 = vmatpush1.msra.mxu0 0.0
  %1220 = vmatprep.subr.mxu0 0.0
  %1221 = vmatpush1.msra.mxu0 0.0
  %1222 = vmatprep.subr.mxu0 0.0
  %1223 = vmatpush1.msra.mxu0 0.0
  %1224 = vmatprep.subr.mxu0 0.0
  %1225 = vmatpush1.msra.mxu0 0.0
  %1226 = vmatprep.mubr.f32.mxu0 0.0
  %v1227 = vand.u32 %v652, 4294901760
  %1228 = vmatmul.mubr.f32.gmra.mrb[0].mxu0 %v1227
  %v1229 = vpop.f32.mrb[0].mxu0
  %v1230 = vadd.f32 %v1139, %v1229
  %v1231 = vpop.f32.mrb[0].mxu0
  %1232 = vmatprep.mubr.f32.mxu0 0.0
  %v1233 = vand.u32 %v655, 4294901760
  %1234 = vmatmul.mubr.f32.gmra.mrb[0].mxu0 %v1233
  %v1235 = vpop.f32.mrb[0].mxu0
  %v1236 = vadd.f32 %v1145, %v1235
  %v1237 = vpop.f32.mrb[0].mxu0
  %1238 = vmatprep.mubr.f32.mxu0 0.0
  %v1239 = vand.u32 %v658, 4294901760
  %1240 = vmatmul.mubr.f32.gmra.mrb[0].mxu0 %v1239
  %v1241 = vpop.f32.mrb[0].mxu0
  %v1242 = vadd.f32 %v1151, %v1241
  %v1243 = vpop.f32.mrb[0].mxu0
  %1244 = vmatprep.mubr.f32.mxu0 0.0
  %v1245 = vand.u32 %v661, 4294901760
  %1246 = vmatmul.mubr.f32.gmra.mrb[0].mxu0 %v1245
  %v1247 = vpop.f32.mrb[0].mxu0
  %v1248 = vadd.f32 %v1157, %v1247
  %v1249 = vpop.f32.mrb[0].mxu0
  %1250 = vdwg.mxu0
  %v1251 = vmul.f32 %v626, %v1230
  %v1252 = vmul.f32 %v632, %v1236
  %v1253 = vmul.f32 %v638, %v1242
  %v1254 = vmul.f32 %v644, %v1248
  %v1255 = vadd.f32 %v1251, %v1252
  %v1256 = vadd.f32 %v1255, %v1253
  %v1257 = vadd.f32 %v1256, %v1254
  %v1258 = vrot.slane %v1257, 4
  %v1259 = vadd.f32 %v1257, %v1258
  %v1260 = vrot.slane %v1259, 2
  %v1261 = vadd.f32 %v1259, %v1260
  %v1262 = vrot.slane %v1261, 1
  %v1263 = vadd.f32 %v1261, %v1262
  %1264 = vst [vmem:[%s4] sm:$0x1] %v1263
  // Predicated region
  $region18: #{_forward_impl.1} parent=0 // pred_check
    _
  $region19: #{_forward_impl.1} parent=0 // pred_check_branch
    %1266 = sbr.rel (0) target = $region21
  $region20: #{_forward_impl.1} parent=0 // pred_region
    _
  $region21: #{_forward_impl.1} parent=0 // pred_fallthru
    _
  // Predicated region
  $region22: #{_forward_impl.1} parent=0 // pred_check
    _
  $region23: #{_forward_impl.1} parent=0 // pred_check_branch
    %1268 = sbr.rel (0) target = $region25
  $region24: #{_forward_impl.1} parent=0 // pred_region
    _
  $region25: #{_forward_impl.1} parent=0 // pred_fallthru
    _

</llo_original>
